<compile_context>
chip_gen: v6e
topology: v6e:2x2x1
jax: 0.10.0
libtpu: 0.0.40
codegen_flags: <defaults>
</compile_context>

<pallas_src>
import jax
import jax.numpy as jnp
from jax import lax
from jax.experimental import pallas as pl
from jax.experimental.pallas import tpu as pltpu


def _distill_kernel(s_ref, t_ref, out_ref, s_gram, t_gram, ssd_acc):
    """One (batch b, k-tile) grid step.

    s_ref/t_ref : (1, C, TK) feature tiles (native dtype).
    out_ref     : (1, 1, 128) per-batch result (lane0=feat SSD, lane1=ctx SSD).
    s_gram/t_gram : (C, C) f32 Gram accumulators (VMEM scratch).
    ssd_acc     : (1, TK) f32 feature-SSD partial accumulator (VMEM scratch).
    """
    k = pl.program_id(1)
    nk = pl.num_programs(1)

    @pl.when(k == 0)
    def _init():
        s_gram[...] = jnp.zeros_like(s_gram)
        t_gram[...] = jnp.zeros_like(t_gram)
        ssd_acc[...] = jnp.zeros_like(ssd_acc)

    s = s_ref[0]  # (C, TK)
    t = t_ref[0]

    # Gram accumulation on the MXU: contract the last (TK) axis of both
    # operands (NT form) -- avoids materializing s.T / t.T in VMEM.
    dn = (((1,), (1,)), ((), ()))
    s_gram[...] += lax.dot_general(s, s, dimension_numbers=dn,
                                   preferred_element_type=jnp.float32)
    t_gram[...] += lax.dot_general(t, t, dimension_numbers=dn,
                                   preferred_element_type=jnp.float32)

    # Feature-SSD partial.  Upcast BEFORE the diff (bf16-safe); only the
    # cheap sublane (C-axis) reduction happens per step, the cross-lane
    # reduction is deferred to the finalize step.
    d = s.astype(jnp.float32) - t.astype(jnp.float32)
    ssd_acc[...] += jnp.sum(d * d, axis=0, keepdims=True)

    @pl.when(k == nk - 1)
    def _finalize():
        feat_ssd = jnp.sum(ssd_acc[...])

        sg = s_gram[...]  # (C, C)
        tg = t_gram[...]
        # F.normalize(x, p=2, dim=1) per batch == column-wise L2 norm of the
        # 2-D Gram.  Clamp the *squared* norm at eps^2 so rsqrt reproduces
        # 1 / max(norm, eps) exactly (PyTorch clamp_min semantics).
        eps2 = jnp.float32(1e-24)
        s_inv = lax.rsqrt(
            jnp.maximum(jnp.sum(sg * sg, axis=0, keepdims=True), eps2))
        t_inv = lax.rsqrt(
            jnp.maximum(jnp.sum(tg * tg, axis=0, keepdims=True), eps2))
        dc = sg * s_inv - tg * t_inv
        ctx_ssd = jnp.sum(dc * dc)

        lane = lax.broadcasted_iota(jnp.int32, out_ref.shape, 2)
        out_ref[...] = (jnp.where(lane == 0, feat_ssd, 0.0)
                        + jnp.where(lane == 1, ctx_ssd, 0.0))


def _choose_tk(C, HW, itemsize):
    """Largest 128-multiple K-tile keeping 2 inputs x 2 buffers <= ~12 MiB."""
    lane = 128
    hw_pad128 = pl.cdiv(HW, lane) * lane
    budget = 12 * 1024 * 1024
    max_tk = budget // (4 * max(C, 1) * itemsize)      # 2 inputs x 2 buffers
    max_tk = max((max_tk // lane) * lane, lane)
    tk = min(max_tk, hw_pad128, 4096)
    return max(tk, lane)


def _pair_ssds(s_feat, t_feat, tile_hw=None):
    """(B, C, H, W) student/teacher -> (feature SSD, context SSD) scalars."""
    B, C, H, W = s_feat.shape
    HW = H * W
    # Keep the native dtype end-to-end (bf16 stays bf16 through the DMA/MXU).
    s = s_feat.reshape(B, C, HW)
    t = t_feat.reshape(B, C, HW)

    if tile_hw is None:
        tk = _choose_tk(C, HW, s.dtype.itemsize)
    else:
        tk = max((int(tile_hw) // 128) * 128, 128)

    hw_pad = pl.cdiv(HW, tk) * tk
    if hw_pad != HW:
        pad = ((0, 0), (0, 0), (0, hw_pad - HW))
        s = jnp.pad(s, pad)  # zero columns contribute 0 to SSD and Gram
        t = jnp.pad(t, pad)
    nk = hw_pad // tk

    # TODO(synk): for very small C (<=64), pack several batch elements per
    # MXU issue to raise MXU utilization; for very large C, tile the (C, C)
    # Gram accumulators as well.

    out = pl.pallas_call(
        _distill_kernel,
        out_shape=jax.ShapeDtypeStruct((B, 1, 128), jnp.float32),
        grid_spec=pltpu.PrefetchScalarGridSpec(
            num_scalar_prefetch=0,
            grid=(B, nk),
            in_specs=[
                pl.BlockSpec((1, C, tk), lambda b, k: (b, 0, k)),
                pl.BlockSpec((1, C, tk), lambda b, k: (b, 0, k)),
            ],
            out_specs=pl.BlockSpec((1, 1, 128), lambda b, k: (b, 0, 0)),
            scratch_shapes=[
                pltpu.VMEM((C, C), jnp.float32),
                pltpu.VMEM((C, C), jnp.float32),
                pltpu.VMEM((1, tk), jnp.float32),
            ],
        ),
        compiler_params=pltpu.CompilerParams(
            dimension_semantics=("parallel", "arbitrary"),
            vmem_limit_bytes=32 * 1024 * 1024,
        ),
    )(s, t)

    feat_ssd = jnp.sum(out[:, 0, 0])
    ctx_ssd = jnp.sum(out[:, 0, 1])
    return feat_ssd, ctx_ssd


def multi_scale_context_alignment_distillation_loss(
        student_features, teacher_features, scales=(1, 1, 1),
        alpha=1.0, beta=1.0, tile_hw=None):
    """JAX/Pallas port of MultiScaleContextAlignmentDistillationLoss.forward."""
    total = jnp.float32(0.0)
    for scale in scales:
        for s_feat, t_feat in zip(student_features, teacher_features):
            if scale != 1:
                # TODO(synk): bilinear F.interpolate path for scale != 1 (the
                # default scales are all 1, so this branch is never taken).
                raise NotImplementedError("scale != 1 not implemented")
            B, C, H, W = s_feat.shape
            feat_ssd, ctx_ssd = _pair_ssds(s_feat, t_feat, tile_hw=tile_hw)
            feature_loss = feat_ssd / jnp.float32(B * C * H * W)
            context_loss = ctx_ssd / jnp.float32(B * C * C)
            total = total + feature_loss + context_loss
    total = total / jnp.float32(len(scales) * len(student_features))
    return total


def _reference_loss(student_features, teacher_features, scales=(1, 1, 1)):
    """Pure-JAX reference mirroring the PyTorch forward (for validation)."""
    total = 0.0
    for _ in scales:
        for s_feat, t_feat in zip(student_features, teacher_features):
            B, C, H, W = s_feat.shape
            feature_loss = jnp.mean((s_feat - t_feat) ** 2)
            s = s_feat.reshape(B, C, -1)
            t = t_feat.reshape(B, C, -1)
            s_rel = jnp.einsum('bck,bdk->bcd', s, s)
            t_rel = jnp.einsum('bck,bdk->bcd', t, t)
            s_rel = s_rel / jnp.maximum(
                jnp.linalg.norm(s_rel, axis=1, keepdims=True), 1e-12)
            t_rel = t_rel / jnp.maximum(
                jnp.linalg.norm(t_rel, axis=1, keepdims=True), 1e-12)
            context_loss = jnp.mean((s_rel - t_rel) ** 2)
            total = total + feature_loss + context_loss
    return total / (len(scales) * len(student_features))


if __name__ == "__main__":
    key = jax.random.PRNGKey(0)

    # --- check 1: default tiling, square spatial ---
    B, C, H, W = 2, 8, 16, 16
    n_features = 2
    keys = jax.random.split(key, 2 * n_features)
    student_features = [
        jax.random.normal(keys[2 * i], (B, C, H, W), jnp.float32)
        for i in range(n_features)
    ]
    teacher_features = [
        jax.random.normal(keys[2 * i + 1], (B, C, H, W), jnp.float32)
        for i in range(n_features)
    ]

    loss = multi_scale_context_alignment_distillation_loss(
        student_features, teacher_features, scales=(1, 1, 1))
    loss = jax.block_until_ready(loss)
    ref = jax.block_until_ready(
        _reference_loss(student_features, teacher_features, scales=(1, 1, 1)))
    assert jnp.allclose(loss, ref, rtol=1e-5, atol=1e-5), (loss, ref)

    # --- check 2: forced small K-tile -> exercises multi-step K reduction
    #              plus zero-padding of a non-128-multiple HW ---
    B2, C2, H2, W2 = 2, 8, 10, 16   # HW = 160 -> padded to 256, nk = 2
    keys2 = jax.random.split(jax.random.PRNGKey(1), 2)
    s2 = [jax.random.normal(keys2[0], (B2, C2, H2, W2), jnp.float32)]
    t2 = [jax.random.normal(keys2[1], (B2, C2, H2, W2), jnp.float32)]
    loss2 = jax.block_until_ready(
        multi_scale_context_alignment_distillation_loss(
            s2, t2, scales=(1, 1, 1), tile_hw=128))
    ref2 = jax.block_until_ready(_reference_loss(s2, t2, scales=(1, 1, 1)))
    assert jnp.allclose(loss2, ref2, rtol=1e-5, atol=1e-5), (loss2, ref2)

    print("KERNEL_OK")
</pallas_src>

<mosaic_0001>
module attributes {stable_mosaic.version = 11 : i64} {
  func.func @_distill_kernel(%arg0: i32, %arg1: i32, %arg2: memref<1x8x256xf32, #tpu.memory_space<vmem>>, %arg3: memref<1x8x256xf32, #tpu.memory_space<vmem>>, %arg4: memref<1x1x128xf32, #tpu.memory_space<vmem>>, %arg5: memref<8x8xf32, #tpu.memory_space<vmem>>, %arg6: memref<8x8xf32, #tpu.memory_space<vmem>>, %arg7: memref<1x256xf32, #tpu.memory_space<vmem>>) attributes {dimension_semantics = [#tpu.dimension_semantics<parallel>, #tpu.dimension_semantics<arbitrary>], iteration_bounds = array<i64: 2, 1>, scalar_prefetch = 0 : i64, scratch_operands = 3 : i64, tpu.core_type = #tpu.core_type<tc>, window_params = [{transform_indices = @transform_0, window_bounds = array<i64: 1, 8, 256>}, {transform_indices = @transform_1, window_bounds = array<i64: 1, 8, 256>}, {transform_indices = @transform_2, window_bounds = array<i64: 1, 1, 128>}]} {
    %c0_i32 = arith.constant 0 : i32
    %0 = arith.cmpi eq, %arg1, %c0_i32 : i32
    %1 = arith.extui %0 : i1 to i32
    %c0_i32_0 = arith.constant 0 : i32
    %2 = arith.cmpi ne, %1, %c0_i32_0 : i32
    scf.if %2 {
      %cst_22 = arith.constant 0.000000e+00 : f32
      %25 = vector.broadcast %cst_22 : f32 to vector<8x8xf32>
      %c0_23 = arith.constant 0 : index
      %c0_24 = arith.constant 0 : index
      %26 = vector.load %arg5[%c0_23, %c0_24] : memref<8x8xf32, #tpu.memory_space<vmem>>, vector<8x8xf32>
      tpu.vector_store %arg5[%c0_23, %c0_24], %25 {strides = array<i32>} : memref<8x8xf32, #tpu.memory_space<vmem>>, vector<8x8xf32>,
      %cst_25 = arith.constant 0.000000e+00 : f32
      %27 = vector.broadcast %cst_25 : f32 to vector<8x8xf32>
      %c0_26 = arith.constant 0 : index
      %c0_27 = arith.constant 0 : index
      %28 = vector.load %arg6[%c0_26, %c0_27] : memref<8x8xf32, #tpu.memory_space<vmem>>, vector<8x8xf32>
      tpu.vector_store %arg6[%c0_26, %c0_27], %27 {strides = array<i32>} : memref<8x8xf32, #tpu.memory_space<vmem>>, vector<8x8xf32>,
      %cst_28 = arith.constant 0.000000e+00 : f32
      %29 = vector.broadcast %cst_28 : f32 to vector<1x256xf32>
      %c0_29 = arith.constant 0 : index
      %c0_30 = arith.constant 0 : index
      %30 = vector.load %arg7[%c0_29, %c0_30] : memref<1x256xf32, #tpu.memory_space<vmem>>, vector<1x256xf32>
      tpu.vector_store %arg7[%c0_29, %c0_30], %29 {strides = array<i32>} : memref<1x256xf32, #tpu.memory_space<vmem>>, vector<1x256xf32>,
    } else {
    }
    %c0 = arith.constant 0 : index
    %c0_1 = arith.constant 0 : index
    %c0_2 = arith.constant 0 : index
    %3 = vector.load %arg2[%c0, %c0_1, %c0_2] : memref<1x8x256xf32, #tpu.memory_space<vmem>>, vector<1x8x256xf32>
    %4 = vector.shape_cast %3 : vector<1x8x256xf32> to vector<8x256xf32>
    %c0_3 = arith.constant 0 : index
    %c0_4 = arith.constant 0 : index
    %c0_5 = arith.constant 0 : index
    %5 = vector.load %arg3[%c0_3, %c0_4, %c0_5] : memref<1x8x256xf32, #tpu.memory_space<vmem>>, vector<1x8x256xf32>
    %6 = vector.shape_cast %5 : vector<1x8x256xf32> to vector<8x256xf32>
    %c0_6 = arith.constant 0 : index
    %c0_7 = arith.constant 0 : index
    %7 = vector.load %arg5[%c0_6, %c0_7] : memref<8x8xf32, #tpu.memory_space<vmem>>, vector<8x8xf32>
    %cst = arith.constant dense<0.000000e+00> : vector<8x8xf32>
    %8 = tpu.matmul %4, %4, %cst {dimension_numbers = #tpu.dot_dimension_numbers<[1], [1], [0], [0], [0, 0, 1, 0], [], []>} : vector<8x256xf32>, vector<8x256xf32>, vector<8x8xf32> -> vector<8x8xf32>
    %9 = arith.addf %7, %8 : vector<8x8xf32>
    %c0_8 = arith.constant 0 : index
    %c0_9 = arith.constant 0 : index
    %10 = vector.load %arg5[%c0_8, %c0_9] : memref<8x8xf32, #tpu.memory_space<vmem>>, vector<8x8xf32>
    tpu.vector_store %arg5[%c0_8, %c0_9], %9 {strides = array<i32>} : memref<8x8xf32, #tpu.memory_space<vmem>>, vector<8x8xf32>,
    %c0_10 = arith.constant 0 : index
    %c0_11 = arith.constant 0 : index
    %11 = vector.load %arg6[%c0_10, %c0_11] : memref<8x8xf32, #tpu.memory_space<vmem>>, vector<8x8xf32>
    %cst_12 = arith.constant dense<0.000000e+00> : vector<8x8xf32>
    %12 = tpu.matmul %6, %6, %cst_12 {dimension_numbers = #tpu.dot_dimension_numbers<[1], [1], [0], [0], [0, 0, 1, 0], [], []>} : vector<8x256xf32>, vector<8x256xf32>, vector<8x8xf32> -> vector<8x8xf32>
    %13 = arith.addf %11, %12 : vector<8x8xf32>
    %c0_13 = arith.constant 0 : index
    %c0_14 = arith.constant 0 : index
    %14 = vector.load %arg6[%c0_13, %c0_14] : memref<8x8xf32, #tpu.memory_space<vmem>>, vector<8x8xf32>
    tpu.vector_store %arg6[%c0_13, %c0_14], %13 {strides = array<i32>} : memref<8x8xf32, #tpu.memory_space<vmem>>, vector<8x8xf32>,
    %15 = arith.subf %4, %6 : vector<8x256xf32>
    %c0_15 = arith.constant 0 : index
    %c0_16 = arith.constant 0 : index
    %16 = vector.load %arg7[%c0_15, %c0_16] : memref<1x256xf32, #tpu.memory_space<vmem>>, vector<1x256xf32>
    %17 = arith.mulf %15, %15 : vector<8x256xf32>
    %cst_17 = arith.constant dense<0.000000e+00> : vector<256xf32>
    %18 = vector.multi_reduction <add>, %17, %cst_17 [0] : vector<8x256xf32> to vector<256xf32>
    %19 = vector.shape_cast %18 : vector<256xf32> to vector<1x256xf32>
    %20 = arith.addf %16, %19 : vector<1x256xf32>
    %c0_18 = arith.constant 0 : index
    %c0_19 = arith.constant 0 : index
    %21 = vector.load %arg7[%c0_18, %c0_19] : memref<1x256xf32, #tpu.memory_space<vmem>>, vector<1x256xf32>
    tpu.vector_store %arg7[%c0_18, %c0_19], %20 {strides = array<i32>} : memref<1x256xf32, #tpu.memory_space<vmem>>, vector<1x256xf32>,
    %c0_i32_20 = arith.constant 0 : i32
    %22 = arith.cmpi eq, %arg1, %c0_i32_20 : i32
    %23 = arith.extui %22 : i1 to i32
    %c0_i32_21 = arith.constant 0 : i32
    %24 = arith.cmpi ne, %23, %c0_i32_21 : i32
    scf.if %24 {
      %c0_22 = arith.constant 0 : index
      %c0_23 = arith.constant 0 : index
      %25 = vector.load %arg7[%c0_22, %c0_23] : memref<1x256xf32, #tpu.memory_space<vmem>>, vector<1x256xf32>
      %26 = vector.shape_cast %25 : vector<1x256xf32> to vector<1x1x256xf32>
      %cst_24 = arith.constant dense<0.000000e+00> : vector<1xf32>
      %27 = vector.multi_reduction <add>, %26, %cst_24 [1, 2] : vector<1x1x256xf32> to vector<1xf32>
      %28 = vector.shape_cast %27 : vector<1xf32> to vector<1x1x1xf32>
      %29 = vector.extract %28[0, 0, 0] : f32 from vector<1x1x1xf32>
      %c0_25 = arith.constant 0 : index
      %c0_26 = arith.constant 0 : index
      %30 = vector.load %arg5[%c0_25, %c0_26] : memref<8x8xf32, #tpu.memory_space<vmem>>, vector<8x8xf32>
      %c0_27 = arith.constant 0 : index
      %c0_28 = arith.constant 0 : index
      %31 = vector.load %arg6[%c0_27, %c0_28] : memref<8x8xf32, #tpu.memory_space<vmem>>, vector<8x8xf32>
      %32 = arith.mulf %30, %30 : vector<8x8xf32>
      %cst_29 = arith.constant dense<0.000000e+00> : vector<8xf32>
      %33 = vector.multi_reduction <add>, %32, %cst_29 [0] : vector<8x8xf32> to vector<8xf32>
      %34 = vector.shape_cast %33 : vector<8xf32> to vector<1x8xf32>
      %cst_30 = arith.constant 1.000000e-24 : f32
      %35 = vector.broadcast %cst_30 : f32 to vector<1x8xf32>
      %36 = arith.maximumf %34, %35 : vector<1x8xf32>
      %37 = math.rsqrt %36 : vector<1x8xf32>
      %38 = arith.mulf %31, %31 : vector<8x8xf32>
      %cst_31 = arith.constant dense<0.000000e+00> : vector<8xf32>
      %39 = vector.multi_reduction <add>, %38, %cst_31 [0] : vector<8x8xf32> to vector<8xf32>
      %40 = vector.shape_cast %39 : vector<8xf32> to vector<1x8xf32>
      %cst_32 = arith.constant 1.000000e-24 : f32
      %41 = vector.broadcast %cst_32 : f32 to vector<1x8xf32>
      %42 = arith.maximumf %40, %41 : vector<1x8xf32>
      %43 = math.rsqrt %42 : vector<1x8xf32>
      %44 = vector.broadcast %37 : vector<1x8xf32> to vector<8x8xf32>
      %45 = arith.mulf %30, %44 : vector<8x8xf32>
      %46 = vector.broadcast %43 : vector<1x8xf32> to vector<8x8xf32>
      %47 = arith.mulf %31, %46 : vector<8x8xf32>
      %48 = arith.subf %45, %47 : vector<8x8xf32>
      %49 = arith.mulf %48, %48 : vector<8x8xf32>
      %50 = vector.shape_cast %49 : vector<8x8xf32> to vector<1x8x8xf32>
      %cst_33 = arith.constant dense<0.000000e+00> : vector<1xf32>
      %51 = vector.multi_reduction <add>, %50, %cst_33 [1, 2] : vector<1x8x8xf32> to vector<1xf32>
      %52 = vector.shape_cast %51 : vector<1xf32> to vector<1x1x1xf32>
      %53 = vector.extract %52[0, 0, 0] : f32 from vector<1x1x1xf32>
      %54 = tpu.iota {dimensions = array<i32: 2>} : vector<1x1x128xi32>
      %c0_i32_34 = arith.constant 0 : i32
      %55 = vector.broadcast %c0_i32_34 : i32 to vector<1x1x128xi32>
      %56 = arith.cmpi eq, %54, %55 : vector<1x1x128xi32>
      %cst_35 = arith.constant 0.000000e+00 : f32
      %57 = vector.broadcast %29 : f32 to vector<1x1x128xf32>
      %58 = vector.broadcast %cst_35 : f32 to vector<1x1x128xf32>
      %59 = arith.select %56, %57, %58 : vector<1x1x128xi1>, vector<1x1x128xf32>
      %c1_i32 = arith.constant 1 : i32
      %60 = vector.broadcast %c1_i32 : i32 to vector<1x1x128xi32>
      %61 = arith.cmpi eq, %54, %60 : vector<1x1x128xi32>
      %cst_36 = arith.constant 0.000000e+00 : f32
      %62 = vector.broadcast %53 : f32 to vector<1x1x128xf32>
      %63 = vector.broadcast %cst_36 : f32 to vector<1x1x128xf32>
      %64 = arith.select %61, %62, %63 : vector<1x1x128xi1>, vector<1x1x128xf32>
      %65 = arith.addf %59, %64 : vector<1x1x128xf32>
      %c0_37 = arith.constant 0 : index
      %c0_38 = arith.constant 0 : index
      %c0_39 = arith.constant 0 : index
      %66 = vector.load %arg4[%c0_37, %c0_38, %c0_39] : memref<1x1x128xf32, #tpu.memory_space<vmem>>, vector<1x1x128xf32>
      tpu.vector_store %arg4[%c0_37, %c0_38, %c0_39], %65 {strides = array<i32>} : memref<1x1x128xf32, #tpu.memory_space<vmem>>, vector<1x1x128xf32>,
    } else {
    }
    return
  }
  func.func @transform_0(%arg0: i32, %arg1: i32) -> (i32, i32, i32) {
    %c0_i32 = arith.constant 0 : i32
    %c0_i32_0 = arith.constant 0 : i32
    return %arg0, %c0_i32, %arg1 : i32, i32, i32
  }
  func.func @transform_1(%arg0: i32, %arg1: i32) -> (i32, i32, i32) {
    %c0_i32 = arith.constant 0 : i32
    %c0_i32_0 = arith.constant 0 : i32
    return %arg0, %c0_i32, %arg1 : i32, i32, i32
  }
  func.func @transform_2(%arg0: i32, %arg1: i32) -> (i32, i32, i32) {
    %c0_i32 = arith.constant 0 : i32
    %c0_i32_0 = arith.constant 0 : i32
    %c0_i32_1 = arith.constant 0 : i32
    return %arg0, %c0_i32, %c0_i32_0 : i32, i32, i32
  }
}

</mosaic_0001>

<llo_original>
// kernel: tpu_custom_call.1
$region0: #{tpu_custom_call.1}
  #allocation0 [shape = 'u32[]', space=smem, size = 0x4, offset = 0x4, fixed_abs, tag = 'smem constant byte address 0x4 - core index']
  #allocation1 [shape = 'u32[144,128]{1,0:T(1,128)}', space=vmem, size = 0x12000, scoped, tag = 'internal scratch']
  #allocation2 [shape = 'f32[8,8]{1,0:T(8,128)}', space=vmem, size = 0x1000, scoped, tag = 'scratch operand']
  #allocation3 [shape = 'f32[8,8]{1,0:T(8,128)}', space=vmem, size = 0x1000, scoped, tag = 'scratch operand']
  #allocation4 [shape = 'f32[1,256]{1,0:T(1,128)}', space=vmem, size = 0x400, scoped, tag = 'scratch operand']
  %s0 = inlined_call_operand.hbm [shape: f32[2,8,256], index: 0, kind: input, shape index: {}]
  %s1 = inlined_call_operand.hbm [shape: f32[2,8,256], index: 1, kind: input, shape index: {}]
  %s2 = inlined_call_operand.hbm [shape: f32[2,1,128], index: 2, kind: output, shape index: {}]
  %s3 = sld [smem:[#allocation0]]
  $region57: #{tpu_custom_call.1} parent=0
    _
  %s5 = ssub.s32 1, %s3
  %s6 = scalar_select 0, %s5, %s3
  $region1: #{tpu_custom_call.1} parent=0
    #allocation5 [shape = 'u8[16384]{0}', space=vmem, size = 0x4000, scoped, tag = 'input window, operand 0']
    #allocation6 [shape = 's32[2]{0}', space=sflag, size = 0x8, scoped, tag = 'scoped memory for tpu_custom_call.1']
    #allocation7 [shape = 's32[2]{0}', space=sflag, size = 0x8, scoped, tag = 'scoped memory for tpu_custom_call.1']
    #allocation8 [shape = 'u8[16384]{0}', space=vmem, size = 0x4000, scoped, tag = 'input window, operand 1']
    #allocation9 [shape = 's32[2]{0}', space=sflag, size = 0x8, scoped, tag = 'scoped memory for tpu_custom_call.1']
    #allocation10 [shape = 'u8[1024]{0}', space=vmem, size = 0x400, scoped, tag = 'output window, operand 0']
    %7 = vsyncpa [#allocation6], 0
    %s8 = scalar_lea.sflag [#allocation6], 1
    %9 = vsyncpa %s8, 0
    %10 = vsyncpa [#allocation9], 0
    %s11 = scalar_lea.sflag [#allocation9], 1
    %12 = vsyncpa %s11, 0
    %13 = vsyncpa [#allocation7], 0
    %s14 = scalar_lea.sflag [#allocation7], 1
    %15 = vsyncpa %s14, 0
    loop: start=0, step=1, limit=4
    $region2: #{tpu_custom_call.1} parent=1 // loop_pre_header
      _
    $region3: #{tpu_custom_call.1} parent=1 // loop_header
      %s17 = sphi 0, %s21
      %p18 = scmp.ge.s32.totalorder %s17, 4
      %s24 = sphi 0, %s36
      %s25 = sphi 0, %s32
      %s26 = sphi 0, %s24
      %s27 = sphi 0, %s25
      %s28 = sphi 0, %s26
      %s29 = sphi 0, %s27
      %s41 = sphi 0, %s43
      %s44 = sphi 0, %s41
      %s45 = sphi 0, %s44
      %s61 = sphi 0, %s45
      %s69 = sphi 0, %s71
      %s72 = sphi 0, %s69
      %s73 = sphi 0, %s72
      %s89 = sphi 0, %s73
      %s95 = sphi 0, %s97
      %s98 = sphi 0, %s95
      %s99 = sphi 0, %s98
      %s115 = sphi 0, %s99
    $region4: #{tpu_custom_call.1} parent=1 // loop_header_branch
      %20 = sbr.rel (%p18) target = $region8
    $region5: #{tpu_custom_call.1} parent=1 // loop_body
      %s22 = ssub.s32 %s17, 1
      %s23 = ssub.s32 %s17, 2
      %s30 = sadd.s32 1, %s25
      %p31 = scmp.ge.s32.totalorder %s30, 1
      %s32 = scalar_select %p31, 0, %s30
      %s33 = sadd.s32 1, %s24
      %s34 = scalar_select %p31, %s33, %s24
      %p35 = scmp.ge.s32.totalorder %s34, 2
      %s36 = scalar_select %p35, 0, %s34
      %s37 = ssub.s32 %s24, %s36
      %s38 = ssub.s32 %s25, %s32
      %s39 = sor.u32 %s37, %s38
      %p40 = scmp.eq.s32.totalorder %s39, 0
      %s42 = sadd.s32 %s41, 1
      %s43 = scalar_select %p40, %s41, %s42
      %p46 = pneg %p40
      %p47 = scmp.eq.s32.totalorder %s17, 1
      %p48 = por %p46, %p47
      %p49 = scmp.ne.s32.totalorder %s41, %s44
      %p50 = scmp.eq.s32.totalorder %s17, 0
      %p51 = por %p49, %p50
      %p52 = scmp.ne.s32.totalorder %s41, %s44
      %p53 = scmp.eq.s32.totalorder %s22, 1
      %p54 = por %p52, %p53
      %p55 = scmp.ne.s32.totalorder %s44, %s45
      %p56 = scmp.eq.s32.totalorder %s22, 0
      %p57 = por %p55, %p56
      %p58 = scmp.ne.s32.totalorder %s44, %s45
      %p59 = scmp.eq.s32.totalorder %s23, 1
      %p60 = por %p58, %p59
      %p62 = scmp.ne.s32.totalorder %s45, %s61
      %p63 = scmp.eq.s32.totalorder %s23, 0
      %p64 = por %p62, %p63
      %s65 = ssub.s32 %s24, %s36
      %s66 = ssub.s32 %s25, %s32
      %s67 = sor.u32 %s65, %s66
      %p68 = scmp.eq.s32.totalorder %s67, 0
      %s70 = sadd.s32 %s69, 1
      %s71 = scalar_select %p68, %s69, %s70
      %p74 = pneg %p68
      %p75 = scmp.eq.s32.totalorder %s17, 1
      %p76 = por %p74, %p75
      %p77 = scmp.ne.s32.totalorder %s69, %s72
      %p78 = scmp.eq.s32.totalorder %s17, 0
      %p79 = por %p77, %p78
      %p80 = scmp.ne.s32.totalorder %s69, %s72
      %p81 = scmp.eq.s32.totalorder %s22, 1
      %p82 = por %p80, %p81
      %p83 = scmp.ne.s32.totalorder %s72, %s73
      %p84 = scmp.eq.s32.totalorder %s22, 0
      %p85 = por %p83, %p84
      %p86 = scmp.ne.s32.totalorder %s72, %s73
      %p87 = scmp.eq.s32.totalorder %s23, 1
      %p88 = por %p86, %p87
      %p90 = scmp.ne.s32.totalorder %s73, %s89
      %p91 = scmp.eq.s32.totalorder %s23, 0
      %p92 = por %p90, %p91
      %s93 = ssub.s32 %s24, %s36
      %p94 = scmp.eq.s32.totalorder %s93, 0
      %s96 = sadd.s32 %s95, 1
      %s97 = scalar_select %p94, %s95, %s96
      %p100 = pneg %p94
      %p101 = scmp.eq.s32.totalorder %s17, 1
      %p102 = por %p100, %p101
      %p103 = scmp.ne.s32.totalorder %s95, %s98
      %p104 = scmp.eq.s32.totalorder %s17, 0
      %p105 = por %p103, %p104
      %p106 = scmp.ne.s32.totalorder %s95, %s98
      %p107 = scmp.eq.s32.totalorder %s22, 1
      %p108 = por %p106, %p107
      %p109 = scmp.ne.s32.totalorder %s98, %s99
      %p110 = scmp.eq.s32.totalorder %s22, 0
      %p111 = por %p109, %p110
      %p112 = scmp.ne.s32.totalorder %s98, %s99
      %p113 = scmp.eq.s32.totalorder %s23, 1
      %p114 = por %p112, %p113
      %p116 = scmp.ne.s32.totalorder %s99, %s115
      %p117 = scmp.eq.s32.totalorder %s23, 0
      %p118 = por %p116, %p117
      %p119 = scmp.le.s32.totalorder 1, %s17
      %p120 = scmp.lt.s32.totalorder %s17, 3
      %p121 = pnand %p119, %p120
      %p122 = pneg %p121
      // Predicated region
      $region9: #{tpu_custom_call.1} parent=5 // pred_check
        _
      $region10: #{tpu_custom_call.1} parent=5 // pred_check_branch
        %124 = sbr.rel (%p121) target = $region12
      $region11: #{tpu_custom_call.1} parent=5 // pred_region
        %s125 = ssub.s32 %s17, 1
      $region12: #{tpu_custom_call.1} parent=5 // pred_fallthru
        _
      %p126 = scmp.lt.s32.totalorder %s17, 2
      // Predicated region
      $region13: #{tpu_custom_call.1} parent=5 // pred_check
        %p127 = pneg %p126
      $region14: #{tpu_custom_call.1} parent=5 // pred_check_branch
        %129 = sbr.rel (%p127) target = $region16
      $region15: #{tpu_custom_call.1} parent=5 // pred_region
        // Predicated region
        $region17: #{tpu_custom_call.1} parent=15 // pred_check
          %p130 = pneg %p51
        $region18: #{tpu_custom_call.1} parent=15 // pred_check_branch
          %132 = sbr.rel (%p130) target = $region20
        $region19: #{tpu_custom_call.1} parent=15 // pred_region
          %s133 = sand.u32 %s41, 1
          %s134 = scalar_lea.sflag [#allocation6], %s133
          %s135 = sand.u32 %s41, 1
          %s136 = smul.addr %s135, 16
          %s137 = scalar_lea.vmem [#allocation5], %s136
          %s138 = smul.u32 2, %s25
          %s140 = ssub.s32 256, 256
          %141 = vsyncadd %s134, %s140
          %s142 = smul.addr %s24, 2
          %s143 = sadd.s32 %s138, %s142
          %s144 = smul.addr %s143, 128
          %s145 = scalar_lea.hbm %s0, %s144
          %s147 = sshll.u32 %s137, 4
          %s148 = int_to_ptr.vmem [resolvable:$true] %s147
          %150 = dma.hbm_to_vmem [thread:$0]  %s145, 256, %s148, %s134
        $region20: #{tpu_custom_call.1} parent=15 // pred_fallthru
          _
        // Predicated region
        $region21: #{tpu_custom_call.1} parent=15 // pred_check
          %p151 = pneg %p79
        $region22: #{tpu_custom_call.1} parent=15 // pred_check_branch
          %153 = sbr.rel (%p151) target = $region24
        $region23: #{tpu_custom_call.1} parent=15 // pred_region
          %s154 = sand.u32 %s69, 1
          %s155 = scalar_lea.sflag [#allocation9], %s154
          %s156 = sand.u32 %s69, 1
          %s157 = smul.addr %s156, 16
          %s158 = scalar_lea.vmem [#allocation8], %s157
          %s159 = smul.u32 2, %s25
          %s161 = ssub.s32 256, 256
          %162 = vsyncadd %s155, %s161
          %s163 = smul.addr %s24, 2
          %s164 = sadd.s32 %s159, %s163
          %s165 = smul.addr %s164, 128
          %s166 = scalar_lea.hbm %s1, %s165
          %s168 = sshll.u32 %s158, 4
          %s169 = int_to_ptr.vmem [resolvable:$true] %s168
          %171 = dma.hbm_to_vmem [thread:$0]  %s166, 256, %s169, %s155
        $region24: #{tpu_custom_call.1} parent=15 // pred_fallthru
          _
      $region16: #{tpu_custom_call.1} parent=5 // pred_fallthru
        _
      %p172 = scmp.le.s32.totalorder 1, %s17
      %p173 = scmp.lt.s32.totalorder %s17, 3
      %p174 = pnand %p172, %p173
      %p175 = pneg %p174
      // Predicated region
      $region25: #{tpu_custom_call.1} parent=5 // pred_check
        _
      $region26: #{tpu_custom_call.1} parent=5 // pred_check_branch
        %177 = sbr.rel (%p174) target = $region28
      $region27: #{tpu_custom_call.1} parent=5 // pred_region
        %s178 = ssub.s32 %s17, 1
        %s179 = sand.u32 %s44, 1
        %s180 = scalar_lea.sflag [#allocation6], %s179
        %s181 = sand.u32 %s44, 1
        %s182 = smul.addr %s181, 16
        %s183 = scalar_lea.vmem [#allocation5], %s182
        // Predicated region
        $region29: #{tpu_custom_call.1} parent=27 // pred_check
          %p184 = pneg %p57
        $region30: #{tpu_custom_call.1} parent=27 // pred_check_branch
          %186 = sbr.rel (%p184) target = $region32
        $region31: #{tpu_custom_call.1} parent=27 // pred_region
          %187 = dma.done %s180, 256
        $region32: #{tpu_custom_call.1} parent=27 // pred_fallthru
          _
        %s188 = sand.u32 %s72, 1
        %s189 = scalar_lea.sflag [#allocation9], %s188
        %s190 = sand.u32 %s72, 1
        %s191 = smul.addr %s190, 16
        %s192 = scalar_lea.vmem [#allocation8], %s191
        // Predicated region
        $region33: #{tpu_custom_call.1} parent=27 // pred_check
          %p193 = pneg %p85
        $region34: #{tpu_custom_call.1} parent=27 // pred_check_branch
          %195 = sbr.rel (%p193) target = $region36
        $region35: #{tpu_custom_call.1} parent=27 // pred_region
          %196 = dma.done %s189, 256
        $region36: #{tpu_custom_call.1} parent=27 // pred_fallthru
          _
        %s197 = sand.u32 %s44, 1
        %s198 = scalar_lea.sflag [#allocation6], %s197
        %s199 = sand.u32 %s44, 1
        %s200 = smul.addr %s199, 16
        %s201 = scalar_lea.vmem [#allocation5], %s200
        %p202 = pneg %p57
        %p203 = pneg %p54
        %s204 = sand.u32 %s72, 1
        %s205 = scalar_lea.sflag [#allocation9], %s204
        %s206 = sand.u32 %s72, 1
        %s207 = smul.addr %s206, 16
        %s208 = scalar_lea.vmem [#allocation8], %s207
        %p209 = pneg %p85
        %p210 = pneg %p82
        %p211 = pneg %p111
        %p212 = pneg %p108
        %s213 = sand.u32 %s98, 1
        %s214 = scalar_lea.sflag [#allocation7], %s213
        %s215 = sand.u32 %s98, 1
        %s216 = scalar_lea.vmem [#allocation10], %s215
        %s217 = smul.u32 2, %s27
        %s218 = smul.u32 2, %s27
        %p219 = scmp.eq.s32.totalorder %s27, 0
        // Predicated region
        $region37: #{tpu_custom_call.1} parent=27 // pred_check
          %p220 = pneg %p219
        $region38: #{tpu_custom_call.1} parent=27 // pred_check_branch
          %222 = sbr.rel (%p220) target = $region40
        $region39: #{tpu_custom_call.1} parent=27 // pred_region
          %vm223 = vcmask 64512
          %224 = vst.msk [vmem:[#allocation2] sm:$0xff] %vm223, 0.0
          %225 = vst.msk [vmem:[#allocation3] sm:$0xff] %vm223, 0.0
          %v226 = vlaneseq
          %vm227 = vcmp.ge.s32.totalorder %v226, 0
          %vm228 = vcmp.lt.s32.totalorder %v226, 256
          %vm229 = vmand %vm227, %vm228
          %230 = vst.msk [vmem:[#allocation4] sm:$0x3] %vm229, 0.0
        $region40: #{tpu_custom_call.1} parent=27 // pred_fallthru
          _
        %v231 = vld [vmem:[%s183] sm:$0xff]
        %v232 = vld [vmem:[%s183 + $0x8] sm:$0xff]
        %v233 = vld [vmem:[%s192] sm:$0xff]
        %v234 = vld [vmem:[%s192 + $0x8] sm:$0xff]
        %v235 = vld [vmem:[#allocation2] sm:$0xff]
        %236 = vmatprep.subr.mxu0 0.0
        %237 = vmatpush1.xpose.msra.mxu0 0.0
        %238 = vmatprep.subr.mxu0 0.0
        %239 = vmatpush1.xpose.msra.mxu0 0.0
        %240 = vmatprep.subr.mxu0 0.0
        %241 = vmatpush1.xpose.msra.mxu0 0.0
        %242 = vmatprep.subr.mxu0 0.0
        %243 = vmatpush1.xpose.msra.mxu0 0.0
        %244 = vmatprep.subr.mxu0 0.0
        %245 = vmatpush1.xpose.msra.mxu0 0.0
        %246 = vmatprep.subr.mxu0 0.0
        %247 = vmatpush1.xpose.msra.mxu0 0.0
        %248 = vmatprep.subr.mxu0 0.0
        %249 = vmatpush1.xpose.msra.mxu0 0.0
        %250 = vmatprep.subr.mxu0 0.0
        %251 = vmatpush1.xpose.msra.mxu0 0.0
        %252 = vmatprep.subr.mxu0 0.0
        %253 = vmatpush1.xpose.msra.mxu0 0.0
        %254 = vmatprep.subr.mxu0 0.0
        %255 = vmatpush1.xpose.msra.mxu0 0.0
        %256 = vmatprep.subr.mxu0 0.0
        %257 = vmatpush1.xpose.msra.mxu0 0.0
        %258 = vmatprep.subr.mxu0 0.0
        %259 = vmatpush1.xpose.msra.mxu0 0.0
        %260 = vmatprep.subr.mxu0 0.0
        %261 = vmatpush1.xpose.msra.mxu0 0.0
        %262 = vmatprep.subr.mxu0 0.0
        %263 = vmatpush1.xpose.msra.mxu0 0.0
        %264 = vmatprep.subr.mxu0 0.0
        %265 = vmatpush1.xpose.msra.mxu0 0.0
        %266 = vmatprep.subr.mxu0 %v232
        %267 = vmatpush1.xpose.msra.mxu0 %v231
        %268 = vmatprep.subr.mxu0 0.0
        %269 = vmatpush2.xpose.msra.mxu0 0.0
        %270 = vmatprep.subr.mxu0 0.0
        %271 = vmatpush2.xpose.msra.mxu0 0.0
        %272 = vmatprep.subr.mxu0 0.0
        %273 = vmatpush2.xpose.msra.mxu0 0.0
        %274 = vmatprep.subr.mxu0 0.0
        %275 = vmatpush2.xpose.msra.mxu0 0.0
        %276 = vmatprep.subr.mxu0 0.0
        %277 = vmatpush2.xpose.msra.mxu0 0.0
        %278 = vmatprep.subr.mxu0 0.0
        %279 = vmatpush2.xpose.msra.mxu0 0.0
        %280 = vmatprep.subr.mxu0 0.0
        %281 = vmatpush2.xpose.msra.mxu0 0.0
        %282 = vmatprep.subr.mxu0 0.0
        %283 = vmatpush2.xpose.msra.mxu0 0.0
        %284 = vmatprep.subr.mxu0 0.0
        %285 = vmatpush2.xpose.msra.mxu0 0.0
        %286 = vmatprep.subr.mxu0 0.0
        %287 = vmatpush2.xpose.msra.mxu0 0.0
        %288 = vmatprep.subr.mxu0 0.0
        %289 = vmatpush2.xpose.msra.mxu0 0.0
        %290 = vmatprep.subr.mxu0 0.0
        %291 = vmatpush2.xpose.msra.mxu0 0.0
        %292 = vmatprep.subr.mxu0 0.0
        %293 = vmatpush2.xpose.msra.mxu0 0.0
        %294 = vmatprep.subr.mxu0 0.0
        %295 = vmatpush2.xpose.msra.mxu0 0.0
        %296 = vmatprep.subr.mxu0 0.0
        %297 = vmatpush2.xpose.msra.mxu0 0.0
        %298 = vmatprep.subr.mxu0 0.0
        %299 = vmatpush2.xpose.msra.mxu0 0.0
        %300 = vmatprep.mubr.f32.mxu0 %v232
        %301 = vmatmul.mubr.f32.gmra.mxu0 %v231
        %v302 = vpop.f32.mrf.mxu0
        %v303 = vadd.f32 0.0, %v302
        %v304 = vpop.f32.mrf.mxu0
        %305 = vdwg.mxu0
        %v306 = vadd.f32 %v235, %v303
        %vm307 = vcmask 64512
        %308 = vst.msk [vmem:[#allocation2] sm:$0xff] %vm307, %v306
        %v309 = vld [vmem:[#allocation3] sm:$0xff]
        %310 = vmatprep.subr.mxu0 0.0
        %311 = vmatpush1.xpose.msra.mxu0 0.0
        %312 = vmatprep.subr.mxu0 0.0
        %313 = vmatpush1.xpose.msra.mxu0 0.0
        %314 = vmatprep.subr.mxu0 0.0
        %315 = vmatpush1.xpose.msra.mxu0 0.0
        %316 = vmatprep.subr.mxu0 0.0
        %317 = vmatpush1.xpose.msra.mxu0 0.0
        %318 = vmatprep.subr.mxu0 0.0
        %319 = vmatpush1.xpose.msra.mxu0 0.0
        %320 = vmatprep.subr.mxu0 0.0
        %321 = vmatpush1.xpose.msra.mxu0 0.0
        %322 = vmatprep.subr.mxu0 0.0
        %323 = vmatpush1.xpose.msra.mxu0 0.0
        %324 = vmatprep.subr.mxu0 0.0
        %325 = vmatpush1.xpose.msra.mxu0 0.0
        %326 = vmatprep.subr.mxu0 0.0
        %327 = vmatpush1.xpose.msra.mxu0 0.0
        %328 = vmatprep.subr.mxu0 0.0
        %329 = vmatpush1.xpose.msra.mxu0 0.0
        %330 = vmatprep.subr.mxu0 0.0
        %331 = vmatpush1.xpose.msra.mxu0 0.0
        %332 = vmatprep.subr.mxu0 0.0
        %333 = vmatpush1.xpose.msra.mxu0 0.0
        %334 = vmatprep.subr.mxu0 0.0
        %335 = vmatpush1.xpose.msra.mxu0 0.0
        %336 = vmatprep.subr.mxu0 0.0
        %337 = vmatpush1.xpose.msra.mxu0 0.0
        %338 = vmatprep.subr.mxu0 0.0
        %339 = vmatpush1.xpose.msra.mxu0 0.0
        %340 = vmatprep.subr.mxu0 %v234
        %341 = vmatpush1.xpose.msra.mxu0 %v233
        %342 = vmatprep.subr.mxu0 0.0
        %343 = vmatpush2.xpose.msra.mxu0 0.0
        %344 = vmatprep.subr.mxu0 0.0
        %345 = vmatpush2.xpose.msra.mxu0 0.0
        %346 = vmatprep.subr.mxu0 0.0
        %347 = vmatpush2.xpose.msra.mxu0 0.0
        %348 = vmatprep.subr.mxu0 0.0
        %349 = vmatpush2.xpose.msra.mxu0 0.0
        %350 = vmatprep.subr.mxu0 0.0
        %351 = vmatpush2.xpose.msra.mxu0 0.0
        %352 = vmatprep.subr.mxu0 0.0
        %353 = vmatpush2.xpose.msra.mxu0 0.0
        %354 = vmatprep.subr.mxu0 0.0
        %355 = vmatpush2.xpose.msra.mxu0 0.0
        %356 = vmatprep.subr.mxu0 0.0
        %357 = vmatpush2.xpose.msra.mxu0 0.0
        %358 = vmatprep.subr.mxu0 0.0
        %359 = vmatpush2.xpose.msra.mxu0 0.0
        %360 = vmatprep.subr.mxu0 0.0
        %361 = vmatpush2.xpose.msra.mxu0 0.0
        %362 = vmatprep.subr.mxu0 0.0
        %363 = vmatpush2.xpose.msra.mxu0 0.0
        %364 = vmatprep.subr.mxu0 0.0
        %365 = vmatpush2.xpose.msra.mxu0 0.0
        %366 = vmatprep.subr.mxu0 0.0
        %367 = vmatpush2.xpose.msra.mxu0 0.0
        %368 = vmatprep.subr.mxu0 0.0
        %369 = vmatpush2.xpose.msra.mxu0 0.0
        %370 = vmatprep.subr.mxu0 0.0
        %371 = vmatpush2.xpose.msra.mxu0 0.0
        %372 = vmatprep.subr.mxu0 0.0
        %373 = vmatpush2.xpose.msra.mxu0 0.0
        %374 = vmatprep.mubr.f32.mxu0 %v234
        %375 = vmatmul.mubr.f32.gmra.mxu0 %v233
        %v376 = vpop.f32.mrf.mxu0
        %v377 = vadd.f32 0.0, %v376
        %v378 = vpop.f32.mrf.mxu0
        %379 = vdwg.mxu0
        %v380 = vadd.f32 %v309, %v377
        %381 = vst.msk [vmem:[#allocation3] sm:$0xff] %vm307, %v380
        %v382 = vsub.f32 %v231, %v233
        %v383 = vsub.f32 %v232, %v234
        %v384 = vld [vmem:[#allocation4] sm:$0x3]
        %v385 = vmul.f32 %v382, %v382
        %v386 = vmul.f32 %v383, %v383
        %v387 = vrot.slane %v385, 4
        %v388 = vadd.f32 %v385, %v387
        %v389 = vrot.slane %v388, 2
        %v390 = vadd.f32 %v388, %v389
        %v391 = vrot.slane %v390, 1
        %v392 = vadd.f32 %v390, %v391
        %v393 = vrot.slane %v386, 4
        %v394 = vadd.f32 %v386, %v393
        %v395 = vrot.slane %v394, 2
        %v396 = vadd.f32 %v394, %v395
        %v397 = vrot.slane %v396, 1
        %v398 = vadd.f32 %v396, %v397
        %v401 = vcombine.low %v392, %v398
        %v403 = vunpack.c.l.s4 1966171168
        %v404 = vunpack.c.0.s8 %v403
        %v405 = vlaneseq
        %v406 = vshrl.u32 %v405, 7
        %v407 = vsub.s32 %v404, %v406
        %v408 = vrot.slane %v401, %v407
        %v410 = vunpack.c.l.s4 1966171168
        %v411 = vunpack.c.0.s8 %v410
        %v412 = vlaneseq
        %v413 = vshrl.u32 %v412, 7
        %v414 = vsub.s32 %v411, %v413
        %v415 = vrot.slane %v408, %v414
        %v417 = vadd.f32 %v384, %v415
        %v418 = vlaneseq
        %vm419 = vcmp.ge.s32.totalorder %v418, 0
        %vm420 = vcmp.lt.s32.totalorder %v418, 256
        %vm421 = vmand %vm419, %vm420
        %422 = vst.msk [vmem:[#allocation4] sm:$0x3] %vm421, %v417
        // Predicated region
        $region41: #{tpu_custom_call.1} parent=27 // pred_check
          %p423 = pneg %p219
        $region42: #{tpu_custom_call.1} parent=27 // pred_check_branch
          %425 = sbr.rel (%p423) target = $region44
        $region43: #{tpu_custom_call.1} parent=27 // pred_region
          %v426 = vld [vmem:[#allocation4] sm:$0x3]
          %v428 = vlaneseq
          %v429 = vshrl.u32 %v428, 7
          %v430 = vsub.s32 0, %v429
          %v431 = vrot.slane %v426, %v430
          %v432 = vlaneseq
          %v433 = vshrl.u32 %v432, 7
          %v434 = vsub.s32 1, %v433
          %v435 = vrot.slane %v426, %v434
          %vm438 = vcmask 1040384
          %v439 = vsel %vm438, %v431, 0.0
          %v440 = vsel %vm438, %v435, 0.0
          %v441 = vadd.f32 %v439, %v440
          %442 = vadd.xlane.f32.xlu0 %v441
          %v443 = vpop.xlane.xlu0 %442
          %v444 = vrot.slane %v443, 4
          %v445 = vadd.f32 %v443, %v444
          %v446 = vrot.slane %v445, 2
          %v447 = vadd.f32 %v445, %v446
          %v448 = vrot.slane %v447, 1
          %v449 = vadd.f32 %v447, %v448
          %s450 = vtos %v449
          %v451 = vld [vmem:[#allocation2] sm:$0xff]
          %v452 = vld [vmem:[#allocation3] sm:$0xff]
          %v453 = vmul.f32 %v451, %v451
          %v454 = vsel %vm307, %v453, 0.0
          %v455 = vrot.slane %v454, 4
          %v456 = vadd.f32 %v454, %v455
          %v457 = vrot.slane %v456, 2
          %v458 = vadd.f32 %v456, %v457
          %v459 = vrot.slane %v458, 1
          %v460 = vadd.f32 %v458, %v459
          %v461 = vmax.f32 %v460, 1e-24
          %v462 = vrsqrt.pop %v461
          %v463 = vmul.f32 %v452, %v452
          %v464 = vsel %vm307, %v463, 0.0
          %v465 = vrot.slane %v464, 4
          %v466 = vadd.f32 %v464, %v465
          %v467 = vrot.slane %v466, 2
          %v468 = vadd.f32 %v466, %v467
          %v469 = vrot.slane %v468, 1
          %v470 = vadd.f32 %v468, %v469
          %v471 = vmax.f32 %v470, 1e-24
          %v472 = vrsqrt.pop %v471
          %v473 = vmul.f32 %v451, %v462
          %v474 = vmul.f32 %v452, %v472
          %v475 = vsub.f32 %v473, %v474
          %v476 = vmul.f32 %v475, %v475
          %v477 = vsel %vm307, %v476, 0.0
          %478 = vadd.xlane.f32.xlu0 %v477
          %v479 = vpop.xlane.xlu0 %478
          %v480 = vrot.slane %v479, 4
          %v481 = vadd.f32 %v479, %v480
          %v482 = vrot.slane %v481, 2
          %v483 = vadd.f32 %v481, %v482
          %v484 = vrot.slane %v483, 1
          %v485 = vadd.f32 %v483, %v484
          %s486 = vtos %v485
          %v487 = vlaneseq
          %v488 = vand.u32 %v487, 127
          %vm489 = vcmp.eq.s32.totalorder %v488, 0
          %v490 = vstv %s450
          %v491 = vsel %vm489, %v490, 0.0
          %vm492 = vcmp.eq.s32.totalorder %v488, 1
          %v493 = vstv %s486
          %v494 = vsel %vm492, %v493, 0.0
          %v495 = vadd.f32 %v491, %v494
          %496 = vst [vmem:[%s216] sm:$0x1] %v495
        $region44: #{tpu_custom_call.1} parent=27 // pred_fallthru
          _
        %s497 = sand.u32 %s98, 1
        %s498 = scalar_lea.sflag [#allocation7], %s497
        %s499 = sand.u32 %s98, 1
        %s500 = scalar_lea.vmem [#allocation10], %s499
        // Predicated region
        $region45: #{tpu_custom_call.1} parent=27 // pred_check
          %p501 = pneg %p108
        $region46: #{tpu_custom_call.1} parent=27 // pred_check_branch
          %503 = sbr.rel (%p501) target = $region48
        $region47: #{tpu_custom_call.1} parent=27 // pred_region
          %s505 = ssub.s32 16, 16
          %506 = vsyncadd %s498, %s505
          %s507 = smul.addr %s26, 16
          %s508 = scalar_lea.hbm %s2, %s507
          %s510 = sshll.u32 %s500, 4
          %s511 = int_to_ptr.vmem [resolvable:$true] %s510
          %513 = dma.vmem_to_hbm [thread:$0]  %s511, 16, %s508, %s498
        $region48: #{tpu_custom_call.1} parent=27 // pred_fallthru
          _
      $region28: #{tpu_custom_call.1} parent=5 // pred_fallthru
        _
      %p514 = scmp.le.s32.totalorder 2, %s17
      // Predicated region
      $region49: #{tpu_custom_call.1} parent=5 // pred_check
        %p515 = pneg %p514
      $region50: #{tpu_custom_call.1} parent=5 // pred_check_branch
        %517 = sbr.rel (%p515) target = $region52
      $region51: #{tpu_custom_call.1} parent=5 // pred_region
        %s518 = ssub.s32 %s17, 2
        // Predicated region
        $region53: #{tpu_custom_call.1} parent=51 // pred_check
          %p519 = pneg %p114
        $region54: #{tpu_custom_call.1} parent=51 // pred_check_branch
          %521 = sbr.rel (%p519) target = $region56
        $region55: #{tpu_custom_call.1} parent=51 // pred_region
          %s522 = sand.u32 %s99, 1
          %s523 = scalar_lea.sflag [#allocation7], %s522
          %s524 = sand.u32 %s99, 1
          %s525 = scalar_lea.vmem [#allocation10], %s524
          %526 = dma.done %s523, 16
        $region56: #{tpu_custom_call.1} parent=51 // pred_fallthru
          _
      $region52: #{tpu_custom_call.1} parent=5 // pred_fallthru
        _
    $region6: #{tpu_custom_call.1} parent=1 // loop_footer
      %s21 = sadd.s32 1, %s17
    $region7: #{tpu_custom_call.1} parent=1 // loop_footer_branch
      %16 = sbr.rel target = $region3
    $region8: #{tpu_custom_call.1} parent=1 // loop_exit
      _
    %527 = vsyncpa [#allocation6], 1
    %s528 = scalar_lea.sflag [#allocation6], 1
    %529 = vsyncpa %s528, 1
    %530 = vsyncpa [#allocation9], 1
    %s531 = scalar_lea.sflag [#allocation9], 1
    %532 = vsyncpa %s531, 1
    %533 = vsyncpa [#allocation7], 1
    %s534 = scalar_lea.sflag [#allocation7], 1
    %535 = vsyncpa %s534, 1

</llo_original>
